<compile_context>
chip_gen: v6e
topology: v6e:2x2x1
jax: 0.10.0
libtpu: 0.0.40
codegen_flags: <defaults>
</compile_context>

<pallas_src>
import jax
import jax.numpy as jnp
from jax.experimental import pallas as pl
from jax.experimental.pallas import tpu as pltpu

EPS = 1e-5  # nn.BatchNorm2d default


def _make_block_kernel(n, h, w, c):
    """Fused BasicBlock kernel for fixed (static) shapes."""
    nh, wc = n * h, w * c
    kw = 3 * wc
    inv_cnt = 1.0 / float(n * h * w)

    def channel_allreduce(v):
        # v: (nh, wc) f32, lane layout = x*C + c.
        # Returns (1, wc): per-channel sum over (rows, x), broadcast back to
        # every x position.  Row reduce + lane-roll tree: runs on the XLU slot,
        # no MXU matmul, no (wc, wc) selection constant.
        s = jnp.sum(v, axis=0, keepdims=True)                  # (1, wc)
        if w & (w - 1) == 0:                                   # power-of-two W
            shift = c
            while shift < wc:
                s = s + pltpu.roll(s, shift=shift, axis=1)
                shift *= 2
            return s
        total = s                                              # generic fallback
        for k in range(1, w):
            total = total + pltpu.roll(s, shift=k * c, axis=1)
        return total

    def kernel(x_ref, w1_ref, w2_ref, gb_ref, out_ref, tap_ref):
        # tap_ref: (n, h, 3*wc) tap slab.  Lane block dy holds the activation
        # shifted vertically by (dy - 1); horizontal padding is folded into the
        # Toeplitz weights so there is no lane halo.
        # Zero ONLY the two halo rows (never overwritten by the conv stores).
        zero_row = jnp.zeros((n, 1, wc), jnp.float32)
        tap_ref[:, 0:1, 0:wc] = zero_row                       # dy=0, y=0
        tap_ref[:, h - 1:h, 2 * wc:kw] = zero_row              # dy=2, y=h-1

        def conv(act_rows, w_ref):
            # act_rows: (nh, wc) f32 -> (nh, wc) f32 conv output (pre-BN).
            a = act_rows.reshape(n, h, wc)
            tap_ref[:, :, wc:2 * wc] = a                       # dy = 1 (center)
            tap_ref[:, 1:h, 0:wc] = a[:, 0:h - 1, :]           # dy = 0 (above)
            tap_ref[:, 0:h - 1, 2 * wc:kw] = a[:, 1:h, :]      # dy = 2 (below)
            taps = tap_ref[...].reshape(nh, kw).astype(jnp.bfloat16)
            return jnp.dot(taps, w_ref[...],
                           preferred_element_type=jnp.float32)

        def batchnorm(acc, g_row, b_row):
            # Training-mode batch statistics per channel (nn.BatchNorm2d fwd).
            mean = channel_allreduce(acc) * inv_cnt            # (1, wc)
            cen = acc - mean
            var = channel_allreduce(cen * cen) * inv_cnt       # (1, wc)
            return cen * jax.lax.rsqrt(var + EPS) * g_row + b_row

        gb = gb_ref[...]                                       # (4, wc) f32
        x_rows = x_ref[...]                                    # (nh, wc) f32
        out1 = jnp.maximum(
            batchnorm(conv(x_rows, w1_ref), gb[0:1, :], gb[1:2, :]), 0.0)
        out2 = batchnorm(conv(out1, w2_ref), gb[2:3, :], gb[3:4, :])
        out_ref[...] = jnp.maximum(out2 + x_rows, 0.0)         # residual + ReLU

    return kernel


def _full_spec(shape):
    nd = len(shape)
    return pl.BlockSpec(shape, lambda i, _nd=nd: (0,) * _nd)


def _toeplitz_weights(w_oihw, w_img):
    """PyTorch (Cout, Cin, 3, 3) -> (3*W*Cin, W*Cout) bf16 block-Toeplitz.

    Horizontal zero-padding is folded in: K row (dy, xi, ci) contributes
    w[co, ci, dy, xi - xo + 1] to output lane (xo, co), zero when the kernel
    x-index falls outside [0, 3) (i.e. the tap would read outside the image).
    """
    cout, cin = w_oihw.shape[0], w_oihw.shape[1]
    wt = jnp.transpose(w_oihw, (2, 3, 1, 0)).astype(jnp.float32)   # (3,3,ci,co)
    xi = jnp.arange(w_img)[:, None]                                # input x
    xo = jnp.arange(w_img)[None, :]                                # output x
    big = jnp.zeros((3, w_img, cin, w_img, cout), jnp.float32)
    for dx in range(3):
        sel = (xi == xo + dx - 1).astype(jnp.float32)              # (W, W)
        big = big + (sel[None, :, None, :, None] *
                     wt[:, dx][:, None, :, None, :])
    return big.reshape(3 * w_img * cin, w_img * cout).astype(jnp.bfloat16)


@jax.jit
def basic_block_forward(x_nchw, w1, g1, b1, w2, g2, b2):
    """Forward of BasicBlock_cifar (stride=1, downsample=None), NCHW in/out."""
    n, c, h, w = x_nchw.shape
    wc = w * c

    # NCHW -> (N*H, W*C) rows (lane-dense, W*C = 128 in the test config).
    x_rows = jnp.transpose(x_nchw, (0, 2, 3, 1)).astype(jnp.float32)
    x_rows = x_rows.reshape(n * h, wc)

    w1s = _toeplitz_weights(w1, w)
    w2s = _toeplitz_weights(w2, w)
    gb = jnp.stack([jnp.tile(g1.astype(jnp.float32), w),
                    jnp.tile(b1.astype(jnp.float32), w),
                    jnp.tile(g2.astype(jnp.float32), w),
                    jnp.tile(b2.astype(jnp.float32), w)], axis=0)   # (4, wc)

    kernel = _make_block_kernel(n, h, w, c)
    out_rows = pl.pallas_call(
        kernel,
        out_shape=jax.ShapeDtypeStruct((n * h, wc), jnp.float32),
        grid=(1,),
        in_specs=[_full_spec(x_rows.shape), _full_spec(w1s.shape),
                  _full_spec(w2s.shape), _full_spec(gb.shape)],
        out_specs=_full_spec((n * h, wc)),
        scratch_shapes=[pltpu.VMEM((n, h, 3 * wc), jnp.float32)],
        compiler_params=pltpu.CompilerParams(
            dimension_semantics=("arbitrary",),
            vmem_limit_bytes=32 * 1024 * 1024),
    )(x_rows, w1s, w2s, gb)

    out = out_rows.reshape(n, h, w, c)
    return jnp.transpose(out, (0, 3, 1, 2))                        # back to NCHW


# ---------------------------------------------------------------------------
# Pure-JAX reference (sanity check)
# ---------------------------------------------------------------------------
def _ref_forward(x_nchw, w1, g1, b1, w2, g2, b2):
    def conv3x3(x_nhwc, w_oihw):
        w_hwio = jnp.transpose(w_oihw, (2, 3, 1, 0))
        return jax.lax.conv_general_dilated(
            x_nhwc, w_hwio, window_strides=(1, 1), padding=((1, 1), (1, 1)),
            dimension_numbers=("NHWC", "HWIO", "NHWC"))

    def bn(x_nhwc, g, b):
        mean = jnp.mean(x_nhwc, axis=(0, 1, 2), keepdims=True)
        var = jnp.mean((x_nhwc - mean) ** 2, axis=(0, 1, 2), keepdims=True)
        return (x_nhwc - mean) * jax.lax.rsqrt(var + EPS) * g + b

    x_nhwc = jnp.transpose(x_nchw, (0, 2, 3, 1))
    out = jnp.maximum(bn(conv3x3(x_nhwc, w1), g1, b1), 0.0)
    out = bn(conv3x3(out, w2), g2, b2) + x_nhwc
    out = jnp.maximum(out, 0.0)
    return jnp.transpose(out, (0, 3, 1, 2))


# ---------------------------------------------------------------------------
if __name__ == "__main__":
    # Small CIFAR-style shapes: inplanes = planes = 16, stride = 1.
    N, C, H, W = 2, 16, 8, 8

    key = jax.random.PRNGKey(0)
    k_x, k_w1, k_w2, k_g1, k_b1, k_g2, k_b2 = jax.random.split(key, 7)

    x = jax.random.normal(k_x, (N, C, H, W), dtype=jnp.float32)

    fan_in = C * 3 * 3
    std = (2.0 / fan_in) ** 0.5
    w1 = jax.random.normal(k_w1, (C, C, 3, 3), jnp.float32) * std
    w2 = jax.random.normal(k_w2, (C, C, 3, 3), jnp.float32) * std
    g1 = 1.0 + 0.1 * jax.random.normal(k_g1, (C,), jnp.float32)
    b1 = 0.1 * jax.random.normal(k_b1, (C,), jnp.float32)
    g2 = 1.0 + 0.1 * jax.random.normal(k_g2, (C,), jnp.float32)
    b2 = 0.1 * jax.random.normal(k_b2, (C,), jnp.float32)

    out = jax.block_until_ready(basic_block_forward(x, w1, g1, b1, w2, g2, b2))
    ref = jax.block_until_ready(_ref_forward(x, w1, g1, b1, w2, g2, b2))

    assert out.shape == (N, C, H, W) and out.dtype == jnp.float32
    assert jnp.allclose(out, ref, rtol=2e-2, atol=2e-2), (
        float(jnp.max(jnp.abs(out - ref))))

    print("KERNEL_OK")
</pallas_src>

<mosaic_0001>
module attributes {stable_mosaic.version = 11 : i64} {
  func.func @kernel(%arg0: i32, %arg1: memref<16x128xf32, #tpu.memory_space<vmem>>, %arg2: memref<384x128xbf16, #tpu.memory_space<vmem>>, %arg3: memref<384x128xbf16, #tpu.memory_space<vmem>>, %arg4: memref<4x128xf32, #tpu.memory_space<vmem>>, %arg5: memref<16x128xf32, #tpu.memory_space<vmem>>, %arg6: memref<2x8x384xf32, #tpu.memory_space<vmem>>) attributes {dimension_semantics = [#tpu.dimension_semantics<arbitrary>], iteration_bounds = array<i64: 1>, scalar_prefetch = 0 : i64, scratch_operands = 1 : i64, tpu.core_type = #tpu.core_type<tc>, window_params = [{pipeline_mode = #tpu.pipeline_mode<synchronous>, transform_indices = @transform_0, window_bounds = array<i64: 16, 128>}, {pipeline_mode = #tpu.pipeline_mode<synchronous>, transform_indices = @transform_1, window_bounds = array<i64: 384, 128>}, {pipeline_mode = #tpu.pipeline_mode<synchronous>, transform_indices = @transform_2, window_bounds = array<i64: 384, 128>}, {pipeline_mode = #tpu.pipeline_mode<synchronous>, transform_indices = @transform_3, window_bounds = array<i64: 4, 128>}, {pipeline_mode = #tpu.pipeline_mode<synchronous>, transform_indices = @transform_4, window_bounds = array<i64: 16, 128>}]} {
    %cst = arith.constant 0.000000e+00 : f32
    %0 = vector.broadcast %cst : f32 to vector<2x1x128xf32>
    %c0 = arith.constant 0 : index
    %c0_0 = arith.constant 0 : index
    %c0_1 = arith.constant 0 : index
    %1 = vector.load %arg6[%c0, %c0_0, %c0_1] : memref<2x8x384xf32, #tpu.memory_space<vmem>>, vector<2x1x128xf32>
    tpu.vector_store %arg6[%c0, %c0_0, %c0_1], %0 {strides = array<i32>} : memref<2x8x384xf32, #tpu.memory_space<vmem>>, vector<2x1x128xf32>,
    %c0_2 = arith.constant 0 : index
    %c7 = arith.constant 7 : index
    %c256 = arith.constant 256 : index
    %2 = vector.load %arg6[%c0_2, %c7, %c256] : memref<2x8x384xf32, #tpu.memory_space<vmem>>, vector<2x1x128xf32>
    tpu.vector_store %arg6[%c0_2, %c7, %c256], %0 {strides = array<i32>} : memref<2x8x384xf32, #tpu.memory_space<vmem>>, vector<2x1x128xf32>,
    %c0_3 = arith.constant 0 : index
    %c0_4 = arith.constant 0 : index
    %3 = vector.load %arg4[%c0_3, %c0_4] : memref<4x128xf32, #tpu.memory_space<vmem>>, vector<4x128xf32>
    %c0_5 = arith.constant 0 : index
    %c0_6 = arith.constant 0 : index
    %4 = vector.load %arg1[%c0_5, %c0_6] : memref<16x128xf32, #tpu.memory_space<vmem>>, vector<16x128xf32>
    %5 = vector.shape_cast %4 : vector<16x128xf32> to vector<2x8x128xf32>
    %c0_7 = arith.constant 0 : index
    %c0_8 = arith.constant 0 : index
    %c128 = arith.constant 128 : index
    %6 = vector.load %arg6[%c0_7, %c0_8, %c128] : memref<2x8x384xf32, #tpu.memory_space<vmem>>, vector<2x8x128xf32>
    tpu.vector_store %arg6[%c0_7, %c0_8, %c128], %5 {strides = array<i32>} : memref<2x8x384xf32, #tpu.memory_space<vmem>>, vector<2x8x128xf32>,
    %7 = vector.extract_strided_slice %5 {offsets = [0, 0, 0], sizes = [2, 7, 128], strides = [1, 1, 1]} : vector<2x8x128xf32> to vector<2x7x128xf32>
    %c0_9 = arith.constant 0 : index
    %c1 = arith.constant 1 : index
    %c0_10 = arith.constant 0 : index
    %8 = vector.load %arg6[%c0_9, %c1, %c0_10] : memref<2x8x384xf32, #tpu.memory_space<vmem>>, vector<2x7x128xf32>
    tpu.vector_store %arg6[%c0_9, %c1, %c0_10], %7 {strides = array<i32>} : memref<2x8x384xf32, #tpu.memory_space<vmem>>, vector<2x7x128xf32>,
    %9 = vector.extract_strided_slice %5 {offsets = [0, 1, 0], sizes = [2, 7, 128], strides = [1, 1, 1]} : vector<2x8x128xf32> to vector<2x7x128xf32>
    %c0_11 = arith.constant 0 : index
    %c0_12 = arith.constant 0 : index
    %c256_13 = arith.constant 256 : index
    %10 = vector.load %arg6[%c0_11, %c0_12, %c256_13] : memref<2x8x384xf32, #tpu.memory_space<vmem>>, vector<2x7x128xf32>
    tpu.vector_store %arg6[%c0_11, %c0_12, %c256_13], %9 {strides = array<i32>} : memref<2x8x384xf32, #tpu.memory_space<vmem>>, vector<2x7x128xf32>,
    %c0_14 = arith.constant 0 : index
    %c0_15 = arith.constant 0 : index
    %c0_16 = arith.constant 0 : index
    %11 = vector.load %arg6[%c0_14, %c0_15, %c0_16] : memref<2x8x384xf32, #tpu.memory_space<vmem>>, vector<2x8x384xf32>
    %12 = vector.shape_cast %11 : vector<2x8x384xf32> to vector<16x384xf32>
    %13 = arith.truncf %12 : vector<16x384xf32> to vector<16x384xbf16>
    %c0_17 = arith.constant 0 : index
    %c0_18 = arith.constant 0 : index
    %14 = vector.load %arg2[%c0_17, %c0_18] : memref<384x128xbf16, #tpu.memory_space<vmem>>, vector<384x128xbf16>
    %cst_19 = arith.constant dense<0.000000e+00> : vector<16x128xf32>
    %15 = tpu.matmul %13, %14, %cst_19 {dimension_numbers = #tpu.dot_dimension_numbers<[1], [0], [0], [1], [0, 0, 1, 1], [], []>} : vector<16x384xbf16>, vector<384x128xbf16>, vector<16x128xf32> -> vector<16x128xf32>
    %16 = vector.extract_strided_slice %3 {offsets = [0, 0], sizes = [1, 128], strides = [1, 1]} : vector<4x128xf32> to vector<1x128xf32>
    %17 = vector.extract_strided_slice %3 {offsets = [1, 0], sizes = [1, 128], strides = [1, 1]} : vector<4x128xf32> to vector<1x128xf32>
    %cst_20 = arith.constant dense<0.000000e+00> : vector<128xf32>
    %18 = vector.multi_reduction <add>, %15, %cst_20 [0] : vector<16x128xf32> to vector<128xf32>
    %19 = vector.shape_cast %18 : vector<128xf32> to vector<1x128xf32>
    %c16_i32 = arith.constant 16 : i32
    %20 = tpu.dynamic_rotate %19 by %c16_i32 dim 1 : vector<1x128xf32>, i32 -> vector<1x128xf32>
    %21 = arith.addf %19, %20 : vector<1x128xf32>
    %c32_i32 = arith.constant 32 : i32
    %22 = tpu.dynamic_rotate %21 by %c32_i32 dim 1 : vector<1x128xf32>, i32 -> vector<1x128xf32>
    %23 = arith.addf %21, %22 : vector<1x128xf32>
    %c64_i32 = arith.constant 64 : i32
    %24 = tpu.dynamic_rotate %23 by %c64_i32 dim 1 : vector<1x128xf32>, i32 -> vector<1x128xf32>
    %25 = arith.addf %23, %24 : vector<1x128xf32>
    %cst_21 = arith.constant 7.812500e-03 : f32
    %26 = vector.broadcast %cst_21 : f32 to vector<1x128xf32>
    %27 = arith.mulf %25, %26 : vector<1x128xf32>
    %28 = vector.broadcast %27 : vector<1x128xf32> to vector<16x128xf32>
    %29 = arith.subf %15, %28 : vector<16x128xf32>
    %30 = arith.mulf %29, %29 : vector<16x128xf32>
    %cst_22 = arith.constant dense<0.000000e+00> : vector<128xf32>
    %31 = vector.multi_reduction <add>, %30, %cst_22 [0] : vector<16x128xf32> to vector<128xf32>
    %32 = vector.shape_cast %31 : vector<128xf32> to vector<1x128xf32>
    %c16_i32_23 = arith.constant 16 : i32
    %33 = tpu.dynamic_rotate %32 by %c16_i32_23 dim 1 : vector<1x128xf32>, i32 -> vector<1x128xf32>
    %34 = arith.addf %32, %33 : vector<1x128xf32>
    %c32_i32_24 = arith.constant 32 : i32
    %35 = tpu.dynamic_rotate %34 by %c32_i32_24 dim 1 : vector<1x128xf32>, i32 -> vector<1x128xf32>
    %36 = arith.addf %34, %35 : vector<1x128xf32>
    %c64_i32_25 = arith.constant 64 : i32
    %37 = tpu.dynamic_rotate %36 by %c64_i32_25 dim 1 : vector<1x128xf32>, i32 -> vector<1x128xf32>
    %38 = arith.addf %36, %37 : vector<1x128xf32>
    %cst_26 = arith.constant 7.812500e-03 : f32
    %39 = vector.broadcast %cst_26 : f32 to vector<1x128xf32>
    %40 = arith.mulf %38, %39 : vector<1x128xf32>
    %cst_27 = arith.constant 9.99999974E-6 : f32
    %41 = vector.broadcast %cst_27 : f32 to vector<1x128xf32>
    %42 = arith.addf %40, %41 : vector<1x128xf32>
    %43 = math.rsqrt %42 : vector<1x128xf32>
    %44 = vector.broadcast %43 : vector<1x128xf32> to vector<16x128xf32>
    %45 = arith.mulf %29, %44 : vector<16x128xf32>
    %46 = vector.broadcast %16 : vector<1x128xf32> to vector<16x128xf32>
    %47 = arith.mulf %45, %46 : vector<16x128xf32>
    %48 = vector.broadcast %17 : vector<1x128xf32> to vector<16x128xf32>
    %49 = arith.addf %47, %48 : vector<16x128xf32>
    %cst_28 = arith.constant 0.000000e+00 : f32
    %50 = vector.broadcast %cst_28 : f32 to vector<16x128xf32>
    %51 = arith.maximumf %49, %50 : vector<16x128xf32>
    %52 = vector.shape_cast %51 : vector<16x128xf32> to vector<2x8x128xf32>
    %c0_29 = arith.constant 0 : index
    %c0_30 = arith.constant 0 : index
    %c128_31 = arith.constant 128 : index
    %53 = vector.load %arg6[%c0_29, %c0_30, %c128_31] : memref<2x8x384xf32, #tpu.memory_space<vmem>>, vector<2x8x128xf32>
    tpu.vector_store %arg6[%c0_29, %c0_30, %c128_31], %52 {strides = array<i32>} : memref<2x8x384xf32, #tpu.memory_space<vmem>>, vector<2x8x128xf32>,
    %54 = vector.extract_strided_slice %52 {offsets = [0, 0, 0], sizes = [2, 7, 128], strides = [1, 1, 1]} : vector<2x8x128xf32> to vector<2x7x128xf32>
    %c0_32 = arith.constant 0 : index
    %c1_33 = arith.constant 1 : index
    %c0_34 = arith.constant 0 : index
    %55 = vector.load %arg6[%c0_32, %c1_33, %c0_34] : memref<2x8x384xf32, #tpu.memory_space<vmem>>, vector<2x7x128xf32>
    tpu.vector_store %arg6[%c0_32, %c1_33, %c0_34], %54 {strides = array<i32>} : memref<2x8x384xf32, #tpu.memory_space<vmem>>, vector<2x7x128xf32>,
    %56 = vector.extract_strided_slice %52 {offsets = [0, 1, 0], sizes = [2, 7, 128], strides = [1, 1, 1]} : vector<2x8x128xf32> to vector<2x7x128xf32>
    %c0_35 = arith.constant 0 : index
    %c0_36 = arith.constant 0 : index
    %c256_37 = arith.constant 256 : index
    %57 = vector.load %arg6[%c0_35, %c0_36, %c256_37] : memref<2x8x384xf32, #tpu.memory_space<vmem>>, vector<2x7x128xf32>
    tpu.vector_store %arg6[%c0_35, %c0_36, %c256_37], %56 {strides = array<i32>} : memref<2x8x384xf32, #tpu.memory_space<vmem>>, vector<2x7x128xf32>,
    %c0_38 = arith.constant 0 : index
    %c0_39 = arith.constant 0 : index
    %c0_40 = arith.constant 0 : index
    %58 = vector.load %arg6[%c0_38, %c0_39, %c0_40] : memref<2x8x384xf32, #tpu.memory_space<vmem>>, vector<2x8x384xf32>
    %59 = vector.shape_cast %58 : vector<2x8x384xf32> to vector<16x384xf32>
    %60 = arith.truncf %59 : vector<16x384xf32> to vector<16x384xbf16>
    %c0_41 = arith.constant 0 : index
    %c0_42 = arith.constant 0 : index
    %61 = vector.load %arg3[%c0_41, %c0_42] : memref<384x128xbf16, #tpu.memory_space<vmem>>, vector<384x128xbf16>
    %cst_43 = arith.constant dense<0.000000e+00> : vector<16x128xf32>
    %62 = tpu.matmul %60, %61, %cst_43 {dimension_numbers = #tpu.dot_dimension_numbers<[1], [0], [0], [1], [0, 0, 1, 1], [], []>} : vector<16x384xbf16>, vector<384x128xbf16>, vector<16x128xf32> -> vector<16x128xf32>
    %63 = vector.extract_strided_slice %3 {offsets = [2, 0], sizes = [1, 128], strides = [1, 1]} : vector<4x128xf32> to vector<1x128xf32>
    %64 = vector.extract_strided_slice %3 {offsets = [3, 0], sizes = [1, 128], strides = [1, 1]} : vector<4x128xf32> to vector<1x128xf32>
    %cst_44 = arith.constant dense<0.000000e+00> : vector<128xf32>
    %65 = vector.multi_reduction <add>, %62, %cst_44 [0] : vector<16x128xf32> to vector<128xf32>
    %66 = vector.shape_cast %65 : vector<128xf32> to vector<1x128xf32>
    %c16_i32_45 = arith.constant 16 : i32
    %67 = tpu.dynamic_rotate %66 by %c16_i32_45 dim 1 : vector<1x128xf32>, i32 -> vector<1x128xf32>
    %68 = arith.addf %66, %67 : vector<1x128xf32>
    %c32_i32_46 = arith.constant 32 : i32
    %69 = tpu.dynamic_rotate %68 by %c32_i32_46 dim 1 : vector<1x128xf32>, i32 -> vector<1x128xf32>
    %70 = arith.addf %68, %69 : vector<1x128xf32>
    %c64_i32_47 = arith.constant 64 : i32
    %71 = tpu.dynamic_rotate %70 by %c64_i32_47 dim 1 : vector<1x128xf32>, i32 -> vector<1x128xf32>
    %72 = arith.addf %70, %71 : vector<1x128xf32>
    %cst_48 = arith.constant 7.812500e-03 : f32
    %73 = vector.broadcast %cst_48 : f32 to vector<1x128xf32>
    %74 = arith.mulf %72, %73 : vector<1x128xf32>
    %75 = vector.broadcast %74 : vector<1x128xf32> to vector<16x128xf32>
    %76 = arith.subf %62, %75 : vector<16x128xf32>
    %77 = arith.mulf %76, %76 : vector<16x128xf32>
    %cst_49 = arith.constant dense<0.000000e+00> : vector<128xf32>
    %78 = vector.multi_reduction <add>, %77, %cst_49 [0] : vector<16x128xf32> to vector<128xf32>
    %79 = vector.shape_cast %78 : vector<128xf32> to vector<1x128xf32>
    %c16_i32_50 = arith.constant 16 : i32
    %80 = tpu.dynamic_rotate %79 by %c16_i32_50 dim 1 : vector<1x128xf32>, i32 -> vector<1x128xf32>
    %81 = arith.addf %79, %80 : vector<1x128xf32>
    %c32_i32_51 = arith.constant 32 : i32
    %82 = tpu.dynamic_rotate %81 by %c32_i32_51 dim 1 : vector<1x128xf32>, i32 -> vector<1x128xf32>
    %83 = arith.addf %81, %82 : vector<1x128xf32>
    %c64_i32_52 = arith.constant 64 : i32
    %84 = tpu.dynamic_rotate %83 by %c64_i32_52 dim 1 : vector<1x128xf32>, i32 -> vector<1x128xf32>
    %85 = arith.addf %83, %84 : vector<1x128xf32>
    %cst_53 = arith.constant 7.812500e-03 : f32
    %86 = vector.broadcast %cst_53 : f32 to vector<1x128xf32>
    %87 = arith.mulf %85, %86 : vector<1x128xf32>
    %cst_54 = arith.constant 9.99999974E-6 : f32
    %88 = vector.broadcast %cst_54 : f32 to vector<1x128xf32>
    %89 = arith.addf %87, %88 : vector<1x128xf32>
    %90 = math.rsqrt %89 : vector<1x128xf32>
    %91 = vector.broadcast %90 : vector<1x128xf32> to vector<16x128xf32>
    %92 = arith.mulf %76, %91 : vector<16x128xf32>
    %93 = vector.broadcast %63 : vector<1x128xf32> to vector<16x128xf32>
    %94 = arith.mulf %92, %93 : vector<16x128xf32>
    %95 = vector.broadcast %64 : vector<1x128xf32> to vector<16x128xf32>
    %96 = arith.addf %94, %95 : vector<16x128xf32>
    %97 = arith.addf %96, %4 : vector<16x128xf32>
    %cst_55 = arith.constant 0.000000e+00 : f32
    %98 = vector.broadcast %cst_55 : f32 to vector<16x128xf32>
    %99 = arith.maximumf %97, %98 : vector<16x128xf32>
    %c0_56 = arith.constant 0 : index
    %c0_57 = arith.constant 0 : index
    %100 = vector.load %arg5[%c0_56, %c0_57] : memref<16x128xf32, #tpu.memory_space<vmem>>, vector<16x128xf32>
    tpu.vector_store %arg5[%c0_56, %c0_57], %99 {strides = array<i32>} : memref<16x128xf32, #tpu.memory_space<vmem>>, vector<16x128xf32>,
    return
  }
  func.func @transform_0(%arg0: i32) -> (i32, i32) {
    %c0_i32 = arith.constant 0 : i32
    %c0_i32_0 = arith.constant 0 : i32
    %c0_i32_1 = arith.constant 0 : i32
    return %c0_i32, %c0_i32_0 : i32, i32
  }
  func.func @transform_1(%arg0: i32) -> (i32, i32) {
    %c0_i32 = arith.constant 0 : i32
    %c0_i32_0 = arith.constant 0 : i32
    %c0_i32_1 = arith.constant 0 : i32
    return %c0_i32, %c0_i32_0 : i32, i32
  }
  func.func @transform_2(%arg0: i32) -> (i32, i32) {
    %c0_i32 = arith.constant 0 : i32
    %c0_i32_0 = arith.constant 0 : i32
    %c0_i32_1 = arith.constant 0 : i32
    return %c0_i32, %c0_i32_0 : i32, i32
  }
  func.func @transform_3(%arg0: i32) -> (i32, i32) {
    %c0_i32 = arith.constant 0 : i32
    %c0_i32_0 = arith.constant 0 : i32
    %c0_i32_1 = arith.constant 0 : i32
    return %c0_i32, %c0_i32_0 : i32, i32
  }
  func.func @transform_4(%arg0: i32) -> (i32, i32) {
    %c0_i32 = arith.constant 0 : i32
    %c0_i32_0 = arith.constant 0 : i32
    %c0_i32_1 = arith.constant 0 : i32
    return %c0_i32, %c0_i32_0 : i32, i32
  }
}

</mosaic_0001>

<llo_original>
// kernel: tile.23
$region0: #{tile.23}
  #allocation0 [shape = 's32[1]{0}', space=sflag, size = 0x4, scoped, tag = 'scoped memory for tile.23']
  %s0 = inlined_call_operand.vmem [shape: f32[16], index: 0, kind: input, shape index: {}]
  %s1 = inlined_call_operand.vmem [shape: f32[8,16], index: 1, kind: output, shape index: {}]
  // Predicated region
  $region2: #{tile.23} parent=0 // pred_check
    _
  $region3: #{tile.23} parent=0 // pred_check_branch
    %3 = sbr.rel (0) target = $region5
  $region4: #{tile.23} parent=0 // pred_region
    _
  $region5: #{tile.23} parent=0 // pred_fallthru
    _
  %v4 = vld [vmem:[%s0] ss:$0 sm:$0xff]
  %5 = vst [vmem:[%s1] sm:$0xff] %v4

// kernel: tile.36
$region0: #{tile.36}
  %s0 = inlined_call_operand.vmem [shape: f32[8,16], index: 0, kind: input, shape index: {}]
  %s1 = inlined_call_operand.vmem [shape: f32[1,128], index: 1, kind: output, shape index: {}]
  $region1: #{tile.36} parent=0
    #allocation0 [shape = 'u8[4096]{0}', space=vmem, size = 0x1000, scoped, tag = 'scoped mem for output reshape']
    %v2 = vld [vmem:[%s0] sm:$0x1]
    %vm3 = vcmask 130048
    %4 = vst.msk [vmem:[#allocation0] sm:$0x1] %vm3, %v2
    %s5 = scalar_lea.vmem %s0, 7
    %v6 = vld [vmem:[%s5] sm:$0x1]
    %7 = vrot.lane.b32.xlu0 %v6, 112
    %v8 = vpop.permute.xlu0 %7
    %vm9 = vcmask 1048448
    %10 = vst.msk [vmem:[#allocation0] sm:$0x1] %vm9, %v8
    %s11 = scalar_lea.vmem %s0, 6
    %v12 = vld [vmem:[%s11] sm:$0x1]
    %13 = vrot.lane.b32.xlu0 %v12, 96
    %v14 = vpop.permute.xlu0 %13
    %vm15 = vcmask 917248
    %16 = vst.msk [vmem:[#allocation0] sm:$0x1] %vm15, %v14
    %s17 = scalar_lea.vmem %s0, 5
    %v18 = vld [vmem:[%s17] sm:$0x1]
    %19 = vrot.lane.b32.xlu0 %v18, 80
    %v20 = vpop.permute.xlu0 %19
    %vm21 = vcmask 786048
    %22 = vst.msk [vmem:[#allocation0] sm:$0x1] %vm21, %v20
    %s23 = scalar_lea.vmem %s0, 4
    %v24 = vld [vmem:[%s23] sm:$0x1]
    %25 = vrot.lane.b32.xlu0 %v24, 64
    %v26 = vpop.permute.xlu0 %25
    %vm27 = vcmask 654848
    %28 = vst.msk [vmem:[#allocation0] sm:$0x1] %vm27, %v26
    %s29 = scalar_lea.vmem %s0, 3
    %v30 = vld [vmem:[%s29] sm:$0x1]
    %31 = vrot.lane.b32.xlu0 %v30, 48
    %v32 = vpop.permute.xlu0 %31
    %vm33 = vcmask 523648
    %34 = vst.msk [vmem:[#allocation0] sm:$0x1] %vm33, %v32
    %s35 = scalar_lea.vmem %s0, 2
    %v36 = vld [vmem:[%s35] sm:$0x1]
    %37 = vrot.lane.b32.xlu0 %v36, 32
    %v38 = vpop.permute.xlu0 %37
    %vm39 = vcmask 392448
    %40 = vst.msk [vmem:[#allocation0] sm:$0x1] %vm39, %v38
    %s41 = scalar_lea.vmem %s0, 1
    %v42 = vld [vmem:[%s41] sm:$0x1]
    %43 = vrot.lane.b32.xlu0 %v42, 16
    %v44 = vpop.permute.xlu0 %43
    %vm45 = vcmask 261248
    %46 = vst.msk [vmem:[#allocation0] sm:$0x1] %vm45, %v44
    %s48 = sshll.u32 1, 1
    %s49 = ssub.s32 %s48, 1
    %v51 = vld [vmem:[#allocation0] sm:%s49]
    %s52 = sshll.u32 1, 1
    %s53 = ssub.s32 %s52, 1
    %54 = vst [vmem:[%s1] sm:%s53] %v51

// kernel: basic_block_forward.1
$region0: #{basic_block_forward.1}
  #allocation0 [shape = 'u32[]', space=smem, size = 0x4, offset = 0x4, fixed_abs, tag = 'smem constant byte address 0x4 - core index']
  #allocation1 [shape = 'u32[144,128]{1,0:T(1,128)}', space=vmem, size = 0x12000, scoped, tag = 'internal scratch']
  #allocation2 [shape = 'f32[2,8,384]{2,1,0:T(8,128)}', space=vmem, size = 0x6000, scoped, tag = 'scratch operand']
  %s0 = inlined_call_operand.vmem [shape: f32[16,128], index: 0, kind: input, shape index: {}]
  %s1 = inlined_call_operand.vmem [shape: bf16[384,128], index: 1, kind: input, shape index: {}]
  %s2 = inlined_call_operand.vmem [shape: bf16[384,128], index: 2, kind: input, shape index: {}]
  %s3 = inlined_call_operand.vmem [shape: f32[4,128], index: 3, kind: input, shape index: {}]
  %s4 = inlined_call_operand.vmem [shape: f32[16,128], index: 4, kind: output, shape index: {}]
  %s5 = sld [smem:[#allocation0]]
  $region26: #{basic_block_forward.1} parent=0
    _
  %s7 = ssub.s32 1, %s5
  %s8 = scalar_select 0, %s7, %s5
  // Predicated region
  $region2: #{basic_block_forward.1} parent=0 // pred_check
    _
  $region3: #{basic_block_forward.1} parent=0 // pred_check_branch
    %10 = sbr.rel (0) target = $region5
  $region4: #{basic_block_forward.1} parent=0 // pred_region
    _
  $region5: #{basic_block_forward.1} parent=0 // pred_fallthru
    _
  // Predicated region
  $region6: #{basic_block_forward.1} parent=0 // pred_check
    _
  $region7: #{basic_block_forward.1} parent=0 // pred_check_branch
    %12 = sbr.rel (0) target = $region9
  $region8: #{basic_block_forward.1} parent=0 // pred_region
    _
  $region9: #{basic_block_forward.1} parent=0 // pred_fallthru
    _
  // Predicated region
  $region10: #{basic_block_forward.1} parent=0 // pred_check
    _
  $region11: #{basic_block_forward.1} parent=0 // pred_check_branch
    %14 = sbr.rel (0) target = $region13
  $region12: #{basic_block_forward.1} parent=0 // pred_region
    _
  $region13: #{basic_block_forward.1} parent=0 // pred_fallthru
    _
  // Predicated region
  $region14: #{basic_block_forward.1} parent=0 // pred_check
    _
  $region15: #{basic_block_forward.1} parent=0 // pred_check_branch
    %16 = sbr.rel (0) target = $region17
  $region16: #{basic_block_forward.1} parent=0 // pred_region
    _
  $region17: #{basic_block_forward.1} parent=0 // pred_fallthru
    _
  %18 = vst [vmem:[#allocation2] sm:$0x1] 0.0
  %19 = vst [vmem:[#allocation2 + $0x18] sm:$0x1] 0.0
  %20 = vst [vmem:[#allocation2 + $0x17] sm:$0x1] 0.0
  %21 = vst [vmem:[#allocation2 + $0x2f] sm:$0x1] 0.0
  %v22 = vld [vmem:[%s3] sm:$0xf]
  %v23 = vld [vmem:[%s0] sm:$0xff]
  %v24 = vld [vmem:[%s0 + $0x8] sm:$0xff]
  %25 = vst [vmem:[#allocation2 + $0x8] sm:$0xff] %v23
  %26 = vst [vmem:[#allocation2 + $0x20] sm:$0xff] %v24
  %v29 = vrot.slane %v23, 7
  %v30 = vrot.slane %v24, 7
  %33 = vst [vmem:[#allocation2] sm:$0xfe] %v29
  %34 = vst [vmem:[#allocation2 + $0x18] sm:$0xfe] %v30
  %v35 = vrot.slane %v23, 1
  %v36 = vrot.slane %v24, 1
  %39 = vst [vmem:[#allocation2 + $0x10] sm:$0x7f] %v35
  %40 = vst [vmem:[#allocation2 + $0x28] sm:$0x7f] %v36
  %v41 = vld [vmem:[#allocation2] sm:$0xff]
  %v42 = vld [vmem:[#allocation2 + $0x8] sm:$0xff]
  %v43 = vld [vmem:[#allocation2 + $0x10] sm:$0xff]
  %v44 = vld [vmem:[#allocation2 + $0x18] sm:$0xff]
  %v45 = vld [vmem:[#allocation2 + $0x20] sm:$0xff]
  %v46 = vld [vmem:[#allocation2 + $0x28] sm:$0xff]
  %v47 = vpack.c.bf16 %v44, %v41
  %v48 = vpack.c.bf16 %v45, %v42
  %v49 = vpack.c.bf16 %v46, %v43
  %v50 = vld [vmem:[%s1] sm:$0xf]
  %v51 = vld [vmem:[%s1 + $0x4] sm:$0xf]
  %v52 = vld [vmem:[%s1 + $0x8] sm:$0xf]
  %v53 = vld [vmem:[%s1 + $0xc] sm:$0xf]
  %v54 = vld [vmem:[%s1 + $0x10] sm:$0xf]
  %v55 = vld [vmem:[%s1 + $0x14] sm:$0xf]
  %v56 = vld [vmem:[%s1 + $0x18] sm:$0xf]
  %v57 = vld [vmem:[%s1 + $0x1c] sm:$0xf]
  %v58 = vld [vmem:[%s1 + $0x20] sm:$0xf]
  %v59 = vld [vmem:[%s1 + $0x24] sm:$0xf]
  %v60 = vld [vmem:[%s1 + $0x28] sm:$0xf]
  %v61 = vld [vmem:[%s1 + $0x2c] sm:$0xf]
  %v62 = vld [vmem:[%s1 + $0x30] sm:$0xf]
  %v63 = vld [vmem:[%s1 + $0x34] sm:$0xf]
  %v64 = vld [vmem:[%s1 + $0x38] sm:$0xf]
  %v65 = vld [vmem:[%s1 + $0x3c] sm:$0xf]
  %v66 = vld [vmem:[%s1 + $0x40] sm:$0xf]
  %v67 = vld [vmem:[%s1 + $0x44] sm:$0xf]
  %v68 = vld [vmem:[%s1 + $0x48] sm:$0xf]
  %v69 = vld [vmem:[%s1 + $0x4c] sm:$0xf]
  %v70 = vld [vmem:[%s1 + $0x50] sm:$0xf]
  %v71 = vld [vmem:[%s1 + $0x54] sm:$0xf]
  %v72 = vld [vmem:[%s1 + $0x58] sm:$0xf]
  %v73 = vld [vmem:[%s1 + $0x5c] sm:$0xf]
  %v74 = vld [vmem:[%s1 + $0x60] sm:$0xf]
  %v75 = vld [vmem:[%s1 + $0x64] sm:$0xf]
  %v76 = vld [vmem:[%s1 + $0x68] sm:$0xf]
  %v77 = vld [vmem:[%s1 + $0x6c] sm:$0xf]
  %v78 = vld [vmem:[%s1 + $0x70] sm:$0xf]
  %v79 = vld [vmem:[%s1 + $0x74] sm:$0xf]
  %v80 = vld [vmem:[%s1 + $0x78] sm:$0xf]
  %v81 = vld [vmem:[%s1 + $0x7c] sm:$0xf]
  %v82 = vld [vmem:[%s1 + $0x80] sm:$0xf]
  %v83 = vld [vmem:[%s1 + $0x84] sm:$0xf]
  %v84 = vld [vmem:[%s1 + $0x88] sm:$0xf]
  %v85 = vld [vmem:[%s1 + $0x8c] sm:$0xf]
  %v86 = vld [vmem:[%s1 + $0x90] sm:$0xf]
  %v87 = vld [vmem:[%s1 + $0x94] sm:$0xf]
  %v88 = vld [vmem:[%s1 + $0x98] sm:$0xf]
  %v89 = vld [vmem:[%s1 + $0x9c] sm:$0xf]
  %v90 = vld [vmem:[%s1 + $0xa0] sm:$0xf]
  %v91 = vld [vmem:[%s1 + $0xa4] sm:$0xf]
  %v92 = vld [vmem:[%s1 + $0xa8] sm:$0xf]
  %v93 = vld [vmem:[%s1 + $0xac] sm:$0xf]
  %v94 = vld [vmem:[%s1 + $0xb0] sm:$0xf]
  %v95 = vld [vmem:[%s1 + $0xb4] sm:$0xf]
  %v96 = vld [vmem:[%s1 + $0xb8] sm:$0xf]
  %v97 = vld [vmem:[%s1 + $0xbc] sm:$0xf]
  %v146 = vunpack.c.l.b16 %v50
  %v147 = vunpack.c.l.b16 %v51
  %v148 = vunpack.c.l.b16 %v52
  %v149 = vunpack.c.l.b16 %v53
  %v150 = vunpack.c.l.b16 %v54
  %v151 = vunpack.c.l.b16 %v55
  %v152 = vunpack.c.l.b16 %v56
  %v153 = vunpack.c.l.b16 %v57
  %v154 = vunpack.c.l.b16 %v58
  %v155 = vunpack.c.l.b16 %v59
  %v156 = vunpack.c.l.b16 %v60
  %v157 = vunpack.c.l.b16 %v61
  %v158 = vunpack.c.l.b16 %v62
  %v159 = vunpack.c.l.b16 %v63
  %v160 = vunpack.c.l.b16 %v64
  %v161 = vunpack.c.l.b16 %v65
  %v162 = vunpack.c.l.b16 %v66
  %v163 = vunpack.c.l.b16 %v67
  %v164 = vunpack.c.l.b16 %v68
  %v165 = vunpack.c.l.b16 %v69
  %v166 = vunpack.c.l.b16 %v70
  %v167 = vunpack.c.l.b16 %v71
  %v168 = vunpack.c.l.b16 %v72
  %v169 = vunpack.c.l.b16 %v73
  %v170 = vunpack.c.l.b16 %v74
  %v171 = vunpack.c.l.b16 %v75
  %v172 = vunpack.c.l.b16 %v76
  %v173 = vunpack.c.l.b16 %v77
  %v174 = vunpack.c.l.b16 %v78
  %v175 = vunpack.c.l.b16 %v79
  %v176 = vunpack.c.l.b16 %v80
  %v177 = vunpack.c.l.b16 %v81
  %v178 = vunpack.c.l.b16 %v82
  %v179 = vunpack.c.l.b16 %v83
  %v180 = vunpack.c.l.b16 %v84
  %v181 = vunpack.c.l.b16 %v85
  %v182 = vunpack.c.l.b16 %v86
  %v183 = vunpack.c.l.b16 %v87
  %v184 = vunpack.c.l.b16 %v88
  %v185 = vunpack.c.l.b16 %v89
  %v186 = vunpack.c.l.b16 %v90
  %v187 = vunpack.c.l.b16 %v91
  %v188 = vunpack.c.l.b16 %v92
  %v189 = vunpack.c.l.b16 %v93
  %v190 = vunpack.c.l.b16 %v94
  %v191 = vunpack.c.l.b16 %v95
  %v192 = vunpack.c.l.b16 %v96
  %v193 = vunpack.c.l.b16 %v97
  %v194 = vpack.c.b16 %v147, %v146
  %v195 = vpack.c.b16 %v149, %v148
  %v196 = vpack.c.b16 %v151, %v150
  %v197 = vpack.c.b16 %v153, %v152
  %v198 = vpack.c.b16 %v155, %v154
  %v199 = vpack.c.b16 %v157, %v156
  %v200 = vpack.c.b16 %v159, %v158
  %v201 = vpack.c.b16 %v161, %v160
  %v202 = vpack.c.b16 %v163, %v162
  %v203 = vpack.c.b16 %v165, %v164
  %v204 = vpack.c.b16 %v167, %v166
  %v205 = vpack.c.b16 %v169, %v168
  %v206 = vpack.c.b16 %v171, %v170
  %v207 = vpack.c.b16 %v173, %v172
  %v208 = vpack.c.b16 %v175, %v174
  %v209 = vpack.c.b16 %v177, %v176
  %v210 = vpack.c.b16 %v179, %v178
  %v211 = vpack.c.b16 %v181, %v180
  %v212 = vpack.c.b16 %v183, %v182
  %v213 = vpack.c.b16 %v185, %v184
  %v214 = vpack.c.b16 %v187, %v186
  %v215 = vpack.c.b16 %v189, %v188
  %v216 = vpack.c.b16 %v191, %v190
  %v217 = vpack.c.b16 %v193, %v192
  %242 = vmatprep.subr.bf16.mxu0 0
  %243 = vmatpush1.bf16.msra.mxu0 %v201
  %244 = vmatprep.subr.bf16.mxu0 0
  %245 = vmatpush1.bf16.msra.mxu0 %v200
  %246 = vmatprep.subr.bf16.mxu0 0
  %247 = vmatpush1.bf16.msra.mxu0 %v199
  %248 = vmatprep.subr.bf16.mxu0 0
  %249 = vmatpush1.bf16.msra.mxu0 %v198
  %250 = vmatprep.subr.bf16.mxu0 0
  %251 = vmatpush1.bf16.msra.mxu0 %v197
  %252 = vmatprep.subr.bf16.mxu0 0
  %253 = vmatpush1.bf16.msra.mxu0 %v196
  %254 = vmatprep.subr.bf16.mxu0 0
  %255 = vmatpush1.bf16.msra.mxu0 %v195
  %256 = vmatprep.subr.bf16.mxu0 0
  %257 = vmatpush1.bf16.msra.mxu0 %v194
  %258 = vmatprep.subr.bf16.mxu0 0
  %259 = vmatpush2.bf16.msra.mxu0 %v209
  %260 = vmatprep.subr.bf16.mxu0 0
  %261 = vmatpush2.bf16.msra.mxu0 %v208
  %262 = vmatprep.subr.bf16.mxu0 0
  %263 = vmatpush2.bf16.msra.mxu0 %v207
  %264 = vmatprep.subr.bf16.mxu0 0
  %265 = vmatpush2.bf16.msra.mxu0 %v206
  %266 = vmatprep.subr.bf16.mxu0 0
  %267 = vmatpush2.bf16.msra.mxu0 %v205
  %268 = vmatprep.subr.bf16.mxu0 0
  %269 = vmatpush2.bf16.msra.mxu0 %v204
  %270 = vmatprep.subr.bf16.mxu0 0
  %271 = vmatpush2.bf16.msra.mxu0 %v203
  %272 = vmatprep.subr.bf16.mxu0 0
  %273 = vmatpush2.bf16.msra.mxu0 %v202
  %274 = vmatprep.mubr.bf16.mxu0 %v48
  %275 = vmatmul.mubr.bf16.gmra.mxu0 %v47
  %v276 = vpop.f32.mrf.mxu0
  %v277 = vadd.f32 0.0, %v276
  %v278 = vpop.f32.mrf.mxu0
  %v279 = vpop.f32.mrf.mxu0
  %v280 = vadd.f32 0.0, %v279
  %v281 = vpop.f32.mrf.mxu0
  %282 = vdwg.mxu0
  %283 = vmatprep.subr.bf16.mxu0 0
  %284 = vmatpush1.bf16.msra.mxu0 %v217
  %285 = vmatprep.subr.bf16.mxu0 0
  %286 = vmatpush1.bf16.msra.mxu0 %v216
  %287 = vmatprep.subr.bf16.mxu0 0
  %288 = vmatpush1.bf16.msra.mxu0 %v215
  %289 = vmatprep.subr.bf16.mxu0 0
  %290 = vmatpush1.bf16.msra.mxu0 %v214
  %291 = vmatprep.subr.bf16.mxu0 0
  %292 = vmatpush1.bf16.msra.mxu0 %v213
  %293 = vmatprep.subr.bf16.mxu0 0
  %294 = vmatpush1.bf16.msra.mxu0 %v212
  %295 = vmatprep.subr.bf16.mxu0 0
  %296 = vmatpush1.bf16.msra.mxu0 %v211
  %297 = vmatprep.subr.bf16.mxu0 0
  %298 = vmatpush1.bf16.msra.mxu0 %v210
  %299 = vmatprep.subr.bf16.mxu0 0
  %300 = vmatpush2.bf16.msra.mxu0 0
  %301 = vmatprep.subr.bf16.mxu0 0
  %302 = vmatpush2.bf16.msra.mxu0 0
  %303 = vmatprep.subr.bf16.mxu0 0
  %304 = vmatpush2.bf16.msra.mxu0 0
  %305 = vmatprep.subr.bf16.mxu0 0
  %306 = vmatpush2.bf16.msra.mxu0 0
  %307 = vmatprep.subr.bf16.mxu0 0
  %308 = vmatpush2.bf16.msra.mxu0 0
  %309 = vmatprep.subr.bf16.mxu0 0
  %310 = vmatpush2.bf16.msra.mxu0 0
  %311 = vmatprep.subr.bf16.mxu0 0
  %312 = vmatpush2.bf16.msra.mxu0 0
  %313 = vmatprep.subr.bf16.mxu0 0
  %314 = vmatpush2.bf16.msra.mxu0 0
  %315 = vmatprep.mubr.bf16.mxu0 0
  %316 = vmatmul.mubr.bf16.gmra.mxu0 %v49
  %v317 = vpop.f32.mrf.mxu0
  %v318 = vadd.f32 %v277, %v317
  %v319 = vpop.f32.mrf.mxu0
  %v320 = vpop.f32.mrf.mxu0
  %v321 = vadd.f32 %v280, %v320
  %v322 = vpop.f32.mrf.mxu0
  %323 = vdwg.mxu0
  %v324 = vadd.f32 %v318, %v321
  %v325 = vrot.slane %v324, 4
  %v326 = vadd.f32 %v324, %v325
  %v327 = vrot.slane %v326, 2
  %v328 = vadd.f32 %v326, %v327
  %v329 = vrot.slane %v328, 1
  %v330 = vadd.f32 %v328, %v329
  %331 = vrot.lane.b32.xlu0 %v330, 16
  %v332 = vpop.permute.xlu0 %331
  %v333 = vadd.f32 %v330, %v332
  %334 = vrot.lane.b32.xlu0 %v333, 32
  %v335 = vpop.permute.xlu0 %334
  %v336 = vadd.f32 %v333, %v335
  %337 = vrot.lane.b32.xlu0 %v336, 64
  %v338 = vpop.permute.xlu0 %337
  %v339 = vadd.f32 %v336, %v338
  %v340 = vmul.f32 %v339, 0.0078125
  %v341 = vlaneseq
  %v342 = vshrl.u32 %v341, 7
  %v343 = vsub.s32 0, %v342
  %v344 = vrot.slane %v340, %v343
  %v345 = vsub.f32 %v318, %v344
  %v346 = vsub.f32 %v321, %v344
  %v347 = vmul.f32 %v345, %v345
  %v348 = vmul.f32 %v346, %v346
  %v349 = vadd.f32 %v347, %v348
  %v350 = vrot.slane %v349, 4
  %v351 = vadd.f32 %v349, %v350
  %v352 = vrot.slane %v351, 2
  %v353 = vadd.f32 %v351, %v352
  %v354 = vrot.slane %v353, 1
  %v355 = vadd.f32 %v353, %v354
  %356 = vrot.lane.b32.xlu0 %v355, 16
  %v357 = vpop.permute.xlu0 %356
  %v358 = vadd.f32 %v355, %v357
  %359 = vrot.lane.b32.xlu0 %v358, 32
  %v360 = vpop.permute.xlu0 %359
  %v361 = vadd.f32 %v358, %v360
  %362 = vrot.lane.b32.xlu0 %v361, 64
  %v363 = vpop.permute.xlu0 %362
  %v364 = vadd.f32 %v361, %v363
  %v365 = vmul.f32 %v364, 0.0078125
  %v366 = vadd.f32 %v365, 1e-05
  %v367 = vrsqrt.pop %v366
  %v368 = vlaneseq
  %v369 = vshrl.u32 %v368, 7
  %v370 = vsub.s32 0, %v369
  %v371 = vrot.slane %v367, %v370
  %v372 = vmul.f32 %v345, %v371
  %v373 = vmul.f32 %v346, %v371
  %v374 = vlaneseq
  %v375 = vshrl.u32 %v374, 7
  %v376 = vsub.s32 0, %v375
  %v377 = vrot.slane %v22, %v376
  %v378 = vmul.f32 %v372, %v377
  %v379 = vmul.f32 %v373, %v377
  %v380 = vlaneseq
  %v381 = vshrl.u32 %v380, 7
  %v382 = vsub.s32 1, %v381
  %v383 = vrot.slane %v22, %v382
  %v384 = vadd.f32 %v378, %v383
  %v385 = vadd.f32 %v379, %v383
  %v386 = vmax.f32 %v384, 0.0
  %v387 = vmax.f32 %v385, 0.0
  %388 = vst [vmem:[#allocation2 + $0x8] sm:$0xff] %v386
  %389 = vst [vmem:[#allocation2 + $0x20] sm:$0xff] %v387
  %v392 = vrot.slane %v386, 7
  %v393 = vrot.slane %v387, 7
  %396 = vst [vmem:[#allocation2] sm:$0xfe] %v392
  %397 = vst [vmem:[#allocation2 + $0x18] sm:$0xfe] %v393
  %v398 = vrot.slane %v386, 1
  %v399 = vrot.slane %v387, 1
  %402 = vst [vmem:[#allocation2 + $0x10] sm:$0x7f] %v398
  %403 = vst [vmem:[#allocation2 + $0x28] sm:$0x7f] %v399
  %v404 = vld [vmem:[#allocation2] sm:$0xff]
  %v405 = vld [vmem:[#allocation2 + $0x8] sm:$0xff]
  %v406 = vld [vmem:[#allocation2 + $0x10] sm:$0xff]
  %v407 = vld [vmem:[#allocation2 + $0x18] sm:$0xff]
  %v408 = vld [vmem:[#allocation2 + $0x20] sm:$0xff]
  %v409 = vld [vmem:[#allocation2 + $0x28] sm:$0xff]
  %v410 = vpack.c.bf16 %v407, %v404
  %v411 = vpack.c.bf16 %v408, %v405
  %v412 = vpack.c.bf16 %v409, %v406
  %v413 = vld [vmem:[%s2] sm:$0xf]
  %v414 = vld [vmem:[%s2 + $0x4] sm:$0xf]
  %v415 = vld [vmem:[%s2 + $0x8] sm:$0xf]
  %v416 = vld [vmem:[%s2 + $0xc] sm:$0xf]
  %v417 = vld [vmem:[%s2 + $0x10] sm:$0xf]
  %v418 = vld [vmem:[%s2 + $0x14] sm:$0xf]
  %v419 = vld [vmem:[%s2 + $0x18] sm:$0xf]
  %v420 = vld [vmem:[%s2 + $0x1c] sm:$0xf]
  %v421 = vld [vmem:[%s2 + $0x20] sm:$0xf]
  %v422 = vld [vmem:[%s2 + $0x24] sm:$0xf]
  %v423 = vld [vmem:[%s2 + $0x28] sm:$0xf]
  %v424 = vld [vmem:[%s2 + $0x2c] sm:$0xf]
  %v425 = vld [vmem:[%s2 + $0x30] sm:$0xf]
  %v426 = vld [vmem:[%s2 + $0x34] sm:$0xf]
  %v427 = vld [vmem:[%s2 + $0x38] sm:$0xf]
  %v428 = vld [vmem:[%s2 + $0x3c] sm:$0xf]
  %v429 = vld [vmem:[%s2 + $0x40] sm:$0xf]
  %v430 = vld [vmem:[%s2 + $0x44] sm:$0xf]
  %v431 = vld [vmem:[%s2 + $0x48] sm:$0xf]
  %v432 = vld [vmem:[%s2 + $0x4c] sm:$0xf]
  %v433 = vld [vmem:[%s2 + $0x50] sm:$0xf]
  %v434 = vld [vmem:[%s2 + $0x54] sm:$0xf]
  %v435 = vld [vmem:[%s2 + $0x58] sm:$0xf]
  %v436 = vld [vmem:[%s2 + $0x5c] sm:$0xf]
  %v437 = vld [vmem:[%s2 + $0x60] sm:$0xf]
  %v438 = vld [vmem:[%s2 + $0x64] sm:$0xf]
  %v439 = vld [vmem:[%s2 + $0x68] sm:$0xf]
  %v440 = vld [vmem:[%s2 + $0x6c] sm:$0xf]
  %v441 = vld [vmem:[%s2 + $0x70] sm:$0xf]
  %v442 = vld [vmem:[%s2 + $0x74] sm:$0xf]
  %v443 = vld [vmem:[%s2 + $0x78] sm:$0xf]
  %v444 = vld [vmem:[%s2 + $0x7c] sm:$0xf]
  %v445 = vld [vmem:[%s2 + $0x80] sm:$0xf]
  %v446 = vld [vmem:[%s2 + $0x84] sm:$0xf]
  %v447 = vld [vmem:[%s2 + $0x88] sm:$0xf]
  %v448 = vld [vmem:[%s2 + $0x8c] sm:$0xf]
  %v449 = vld [vmem:[%s2 + $0x90] sm:$0xf]
  %v450 = vld [vmem:[%s2 + $0x94] sm:$0xf]
  %v451 = vld [vmem:[%s2 + $0x98] sm:$0xf]
  %v452 = vld [vmem:[%s2 + $0x9c] sm:$0xf]
  %v453 = vld [vmem:[%s2 + $0xa0] sm:$0xf]
  %v454 = vld [vmem:[%s2 + $0xa4] sm:$0xf]
  %v455 = vld [vmem:[%s2 + $0xa8] sm:$0xf]
  %v456 = vld [vmem:[%s2 + $0xac] sm:$0xf]
  %v457 = vld [vmem:[%s2 + $0xb0] sm:$0xf]
  %v458 = vld [vmem:[%s2 + $0xb4] sm:$0xf]
  %v459 = vld [vmem:[%s2 + $0xb8] sm:$0xf]
  %v460 = vld [vmem:[%s2 + $0xbc] sm:$0xf]
  %v509 = vunpack.c.l.b16 %v413
  %v510 = vunpack.c.l.b16 %v414
  %v511 = vunpack.c.l.b16 %v415
  %v512 = vunpack.c.l.b16 %v416
  %v513 = vunpack.c.l.b16 %v417
  %v514 = vunpack.c.l.b16 %v418
  %v515 = vunpack.c.l.b16 %v419
  %v516 = vunpack.c.l.b16 %v420
  %v517 = vunpack.c.l.b16 %v421
  %v518 = vunpack.c.l.b16 %v422
  %v519 = vunpack.c.l.b16 %v423
  %v520 = vunpack.c.l.b16 %v424
  %v521 = vunpack.c.l.b16 %v425
  %v522 = vunpack.c.l.b16 %v426
  %v523 = vunpack.c.l.b16 %v427
  %v524 = vunpack.c.l.b16 %v428
  %v525 = vunpack.c.l.b16 %v429
  %v526 = vunpack.c.l.b16 %v430
  %v527 = vunpack.c.l.b16 %v431
  %v528 = vunpack.c.l.b16 %v432
  %v529 = vunpack.c.l.b16 %v433
  %v530 = vunpack.c.l.b16 %v434
  %v531 = vunpack.c.l.b16 %v435
  %v532 = vunpack.c.l.b16 %v436
  %v533 = vunpack.c.l.b16 %v437
  %v534 = vunpack.c.l.b16 %v438
  %v535 = vunpack.c.l.b16 %v439
  %v536 = vunpack.c.l.b16 %v440
  %v537 = vunpack.c.l.b16 %v441
  %v538 = vunpack.c.l.b16 %v442
  %v539 = vunpack.c.l.b16 %v443
  %v540 = vunpack.c.l.b16 %v444
  %v541 = vunpack.c.l.b16 %v445
  %v542 = vunpack.c.l.b16 %v446
  %v543 = vunpack.c.l.b16 %v447
  %v544 = vunpack.c.l.b16 %v448
  %v545 = vunpack.c.l.b16 %v449
  %v546 = vunpack.c.l.b16 %v450
  %v547 = vunpack.c.l.b16 %v451
  %v548 = vunpack.c.l.b16 %v452
  %v549 = vunpack.c.l.b16 %v453
  %v550 = vunpack.c.l.b16 %v454
  %v551 = vunpack.c.l.b16 %v455
  %v552 = vunpack.c.l.b16 %v456
  %v553 = vunpack.c.l.b16 %v457
  %v554 = vunpack.c.l.b16 %v458
  %v555 = vunpack.c.l.b16 %v459
  %v556 = vunpack.c.l.b16 %v460
  %v557 = vpack.c.b16 %v510, %v509
  %v558 = vpack.c.b16 %v512, %v511
  %v559 = vpack.c.b16 %v514, %v513
  %v560 = vpack.c.b16 %v516, %v515
  %v561 = vpack.c.b16 %v518, %v517
  %v562 = vpack.c.b16 %v520, %v519
  %v563 = vpack.c.b16 %v522, %v521
  %v564 = vpack.c.b16 %v524, %v523
  %v565 = vpack.c.b16 %v526, %v525
  %v566 = vpack.c.b16 %v528, %v527
  %v567 = vpack.c.b16 %v530, %v529
  %v568 = vpack.c.b16 %v532, %v531
  %v569 = vpack.c.b16 %v534, %v533
  %v570 = vpack.c.b16 %v536, %v535
  %v571 = vpack.c.b16 %v538, %v537
  %v572 = vpack.c.b16 %v540, %v539
  %v573 = vpack.c.b16 %v542, %v541
  %v574 = vpack.c.b16 %v544, %v543
  %v575 = vpack.c.b16 %v546, %v545
  %v576 = vpack.c.b16 %v548, %v547
  %v577 = vpack.c.b16 %v550, %v549
  %v578 = vpack.c.b16 %v552, %v551
  %v579 = vpack.c.b16 %v554, %v553
  %v580 = vpack.c.b16 %v556, %v555
  %605 = vmatprep.subr.bf16.mxu0 0
  %606 = vmatpush1.bf16.msra.mxu0 %v564
  %607 = vmatprep.subr.bf16.mxu0 0
  %608 = vmatpush1.bf16.msra.mxu0 %v563
  %609 = vmatprep.subr.bf16.mxu0 0
  %610 = vmatpush1.bf16.msra.mxu0 %v562
  %611 = vmatprep.subr.bf16.mxu0 0
  %612 = vmatpush1.bf16.msra.mxu0 %v561
  %613 = vmatprep.subr.bf16.mxu0 0
  %614 = vmatpush1.bf16.msra.mxu0 %v560
  %615 = vmatprep.subr.bf16.mxu0 0
  %616 = vmatpush1.bf16.msra.mxu0 %v559
  %617 = vmatprep.subr.bf16.mxu0 0
  %618 = vmatpush1.bf16.msra.mxu0 %v558
  %619 = vmatprep.subr.bf16.mxu0 0
  %620 = vmatpush1.bf16.msra.mxu0 %v557
  %621 = vmatprep.subr.bf16.mxu0 0
  %622 = vmatpush2.bf16.msra.mxu0 %v572
  %623 = vmatprep.subr.bf16.mxu0 0
  %624 = vmatpush2.bf16.msra.mxu0 %v571
  %625 = vmatprep.subr.bf16.mxu0 0
  %626 = vmatpush2.bf16.msra.mxu0 %v570
  %627 = vmatprep.subr.bf16.mxu0 0
  %628 = vmatpush2.bf16.msra.mxu0 %v569
  %629 = vmatprep.subr.bf16.mxu0 0
  %630 = vmatpush2.bf16.msra.mxu0 %v568
  %631 = vmatprep.subr.bf16.mxu0 0
  %632 = vmatpush2.bf16.msra.mxu0 %v567
  %633 = vmatprep.subr.bf16.mxu0 0
  %634 = vmatpush2.bf16.msra.mxu0 %v566
  %635 = vmatprep.subr.bf16.mxu0 0
  %636 = vmatpush2.bf16.msra.mxu0 %v565
  %637 = vmatprep.mubr.bf16.mxu0 %v411
  %638 = vmatmul.mubr.bf16.gmra.mxu0 %v410
  %v639 = vpop.f32.mrf.mxu0
  %v640 = vadd.f32 0.0, %v639
  %v641 = vpop.f32.mrf.mxu0
  %v642 = vpop.f32.mrf.mxu0
  %v643 = vadd.f32 0.0, %v642
  %v644 = vpop.f32.mrf.mxu0
  %645 = vdwg.mxu0
  %646 = vmatprep.subr.bf16.mxu0 0
  %647 = vmatpush1.bf16.msra.mxu0 %v580
  %648 = vmatprep.subr.bf16.mxu0 0
  %649 = vmatpush1.bf16.msra.mxu0 %v579
  %650 = vmatprep.subr.bf16.mxu0 0
  %651 = vmatpush1.bf16.msra.mxu0 %v578
  %652 = vmatprep.subr.bf16.mxu0 0
  %653 = vmatpush1.bf16.msra.mxu0 %v577
  %654 = vmatprep.subr.bf16.mxu0 0
  %655 = vmatpush1.bf16.msra.mxu0 %v576
  %656 = vmatprep.subr.bf16.mxu0 0
  %657 = vmatpush1.bf16.msra.mxu0 %v575
  %658 = vmatprep.subr.bf16.mxu0 0
  %659 = vmatpush1.bf16.msra.mxu0 %v574
  %660 = vmatprep.subr.bf16.mxu0 0
  %661 = vmatpush1.bf16.msra.mxu0 %v573
  %662 = vmatprep.subr.bf16.mxu0 0
  %663 = vmatpush2.bf16.msra.mxu0 0
  %664 = vmatprep.subr.bf16.mxu0 0
  %665 = vmatpush2.bf16.msra.mxu0 0
  %666 = vmatprep.subr.bf16.mxu0 0
  %667 = vmatpush2.bf16.msra.mxu0 0
  %668 = vmatprep.subr.bf16.mxu0 0
  %669 = vmatpush2.bf16.msra.mxu0 0
  %670 = vmatprep.subr.bf16.mxu0 0
  %671 = vmatpush2.bf16.msra.mxu0 0
  %672 = vmatprep.subr.bf16.mxu0 0
  %673 = vmatpush2.bf16.msra.mxu0 0
  %674 = vmatprep.subr.bf16.mxu0 0
  %675 = vmatpush2.bf16.msra.mxu0 0
  %676 = vmatprep.subr.bf16.mxu0 0
  %677 = vmatpush2.bf16.msra.mxu0 0
  %678 = vmatprep.mubr.bf16.mxu0 0
  %679 = vmatmul.mubr.bf16.gmra.mxu0 %v412
  %v680 = vpop.f32.mrf.mxu0
  %v681 = vadd.f32 %v640, %v680
  %v682 = vpop.f32.mrf.mxu0
  %v683 = vpop.f32.mrf.mxu0
  %v684 = vadd.f32 %v643, %v683
  %v685 = vpop.f32.mrf.mxu0
  %686 = vdwg.mxu0
  %v687 = vadd.f32 %v681, %v684
  %v688 = vrot.slane %v687, 4
  %v689 = vadd.f32 %v687, %v688
  %v690 = vrot.slane %v689, 2
  %v691 = vadd.f32 %v689, %v690
  %v692 = vrot.slane %v691, 1
  %v693 = vadd.f32 %v691, %v692
  %694 = vrot.lane.b32.xlu0 %v693, 16
  %v695 = vpop.permute.xlu0 %694
  %v696 = vadd.f32 %v693, %v695
  %697 = vrot.lane.b32.xlu0 %v696, 32
  %v698 = vpop.permute.xlu0 %697
  %v699 = vadd.f32 %v696, %v698
  %700 = vrot.lane.b32.xlu0 %v699, 64
  %v701 = vpop.permute.xlu0 %700
  %v702 = vadd.f32 %v699, %v701
  %v703 = vmul.f32 %v702, 0.0078125
  %v704 = vlaneseq
  %v705 = vshrl.u32 %v704, 7
  %v706 = vsub.s32 0, %v705
  %v707 = vrot.slane %v703, %v706
  %v708 = vsub.f32 %v681, %v707
  %v709 = vsub.f32 %v684, %v707
  %v710 = vmul.f32 %v708, %v708
  %v711 = vmul.f32 %v709, %v709
  %v712 = vadd.f32 %v710, %v711
  %v713 = vrot.slane %v712, 4
  %v714 = vadd.f32 %v712, %v713
  %v715 = vrot.slane %v714, 2
  %v716 = vadd.f32 %v714, %v715
  %v717 = vrot.slane %v716, 1
  %v718 = vadd.f32 %v716, %v717
  %719 = vrot.lane.b32.xlu0 %v718, 16
  %v720 = vpop.permute.xlu0 %719
  %v721 = vadd.f32 %v718, %v720
  %722 = vrot.lane.b32.xlu0 %v721, 32
  %v723 = vpop.permute.xlu0 %722
  %v724 = vadd.f32 %v721, %v723
  %725 = vrot.lane.b32.xlu0 %v724, 64
  %v726 = vpop.permute.xlu0 %725
  %v727 = vadd.f32 %v724, %v726
  %v728 = vmul.f32 %v727, 0.0078125
  %v729 = vadd.f32 %v728, 1e-05
  %v730 = vrsqrt.pop %v729
  %v731 = vlaneseq
  %v732 = vshrl.u32 %v731, 7
  %v733 = vsub.s32 0, %v732
  %v734 = vrot.slane %v730, %v733
  %v735 = vmul.f32 %v708, %v734
  %v736 = vmul.f32 %v709, %v734
  %v737 = vlaneseq
  %v738 = vshrl.u32 %v737, 7
  %v739 = vsub.s32 2, %v738
  %v740 = vrot.slane %v22, %v739
  %v741 = vmul.f32 %v735, %v740
  %v742 = vmul.f32 %v736, %v740
  %v743 = vlaneseq
  %v744 = vshrl.u32 %v743, 7
  %v745 = vsub.s32 3, %v744
  %v746 = vrot.slane %v22, %v745
  %v747 = vadd.f32 %v741, %v746
  %v748 = vadd.f32 %v742, %v746
  %v749 = vadd.f32 %v747, %v23
  %v750 = vadd.f32 %v748, %v24
  %v751 = vmax.f32 %v749, 0.0
  %v752 = vmax.f32 %v750, 0.0
  %753 = vst [vmem:[%s4] sm:$0xff] %v751
  %754 = vst [vmem:[%s4 + $0x8] sm:$0xff] %v752
  // Predicated region
  $region18: #{basic_block_forward.1} parent=0 // pred_check
    _
  $region19: #{basic_block_forward.1} parent=0 // pred_check_branch
    %756 = sbr.rel (0) target = $region21
  $region20: #{basic_block_forward.1} parent=0 // pred_region
    _
  $region21: #{basic_block_forward.1} parent=0 // pred_fallthru
    _
  // Predicated region
  $region22: #{basic_block_forward.1} parent=0 // pred_check
    _
  $region23: #{basic_block_forward.1} parent=0 // pred_check_branch
    %758 = sbr.rel (0) target = $region25
  $region24: #{basic_block_forward.1} parent=0 // pred_region
    _
  $region25: #{basic_block_forward.1} parent=0 // pred_fallthru
    _

</llo_original>
